<compile_context>
chip_gen: v7x
topology: tpu7x:2x2x1
jax: 0.10.0
libtpu: 0.0.40
codegen_flags: <defaults>
</compile_context>

<pallas_src>
import functools

import jax
import jax.numpy as jnp
from jax.experimental import pallas as pl
from jax.experimental.pallas import tpu as pltpu

EPS = 1e-5
LANE = 128


def _block_kernel(*refs, n_layers):
    """Fused: [dropout(p=0) -> Linear -> BatchNorm1d -> ReLU] * n_layers,
    then out = x + rescale * y  (rezero residual), all on lane-dense (B, PAD)
    f32 slabs.

    INVARIANT (established in prepare_params / wrapper): every padded feature
    row/col of x, Wt, b, gamma, beta is exactly 0, so padded activations stay
    exactly 0 through Linear/BN/ReLU (var=0 hits rsqrt(eps) but multiplies an
    exact 0) and through the residual add.

    refs = (rescale_smem[1], x[B,PAD], (wt, b, gamma, beta) * n_layers, out[B,PAD])
    """
    rescale_ref = refs[0]                      # (1,) in SMEM
    x_ref = refs[1]                            # (B, PAD) in VMEM
    o_ref = refs[-1]                           # (B, PAD) in VMEM

    x = x_ref[...]
    y = x
    # TODO(synk): stochastic dropout (p>0) not implemented; module uses p=0.0 (identity).
    for i in range(n_layers):                  # unrolled at trace time
        wt_ref, b_ref, g_ref, be_ref = refs[2 + 4 * i: 2 + 4 * (i + 1)]
        # Linear (MXU): y @ Wt + b, Wt pre-transposed & zero-padded to (PAD, PAD).
        # TODO(synk): at realistic sizes pack Wt/activations as bf16 for the
        # v6e/v7x MXU (keep preferred_element_type=f32 and BN stats in f32);
        # at B=8 / hidden=32 this is noise, so stay f32 for exactness.
        y = jnp.dot(y, wt_ref[...], preferred_element_type=jnp.float32)
        y = y + b_ref[...]
        # BatchNorm1d, training mode: biased batch statistics over the batch axis.
        # Cross-sublane reduces go to the XLU slot (slack here) — left as jnp.mean.
        # TODO(synk): running_mean/running_var buffer updates (PyTorch state) not emitted.
        mean = jnp.mean(y, axis=0, keepdims=True)
        yc = y - mean
        var = jnp.mean(yc * yc, axis=0, keepdims=True)
        y = yc * jax.lax.rsqrt(var + EPS)
        y = y * g_ref[...] + be_ref[...]
        y = jnp.maximum(y, 0.0)                # act_func = ReLU
    # Rezero residual on the full lane-dense slab -> unmasked 128-lane stores.
    o_ref[...] = (x + rescale_ref[0] * y).astype(o_ref.dtype)


@functools.partial(jax.jit, static_argnames=("hidden_size", "n_layers"))
def resnet_block_forward(x, prepared_layers, rescale, *, hidden_size, n_layers):
    """Single fused pallas_call for the whole ResNetBlock forward."""
    B = x.shape[0]
    pad = prepared_layers[0][0].shape[0]       # lane-padded feature width (multiple of 128)
    flat_params = [p for layer in prepared_layers for p in layer]

    # Lane-pad x once (padded cols are exactly zero) so every in-kernel store
    # is an unmasked 128-lane vst; slice back to hidden_size at the end.
    x_pad = jnp.zeros((B, pad), jnp.float32).at[:, :hidden_size].set(
        x.astype(jnp.float32))

    flops = 2 * B * pad * pad * n_layers + 10 * B * pad * n_layers
    bytes_accessed = (2 * B * pad * 4 + 4
                      + sum(int(p.size) * 4 for p in flat_params))
    cost = pl.CostEstimate(flops=flops,
                           transcendentals=n_layers * pad,      # rsqrt per feature col
                           bytes_accessed=bytes_accessed)

    kernel = functools.partial(_block_kernel, n_layers=n_layers)
    # TODO(synk): at B=8/hidden=32 wall-clock is launch + weight-DMA latency;
    # amortize by fusing this block into the surrounding model kernel or via the
    # cross-pallas_call weight-prefetch pattern (DMA sem + VMEM ref outputs).
    # TODO(synk): for real batches, tile the batch axis with a "parallel" grid
    # (v7x megacore), B_tile sized for v7x's 64 MiB VMEM, and a two-pass
    # BN-stat accumulator (or precomputed mean/var passed as inputs).
    out_pad = pl.pallas_call(
        kernel,
        out_shape=jax.ShapeDtypeStruct((B, pad), jnp.float32),
        in_specs=[pl.BlockSpec(memory_space=pltpu.MemorySpace.SMEM)]
        + [pl.BlockSpec(memory_space=pltpu.MemorySpace.VMEM)] * (1 + 4 * n_layers),
        out_specs=pl.BlockSpec(memory_space=pltpu.MemorySpace.VMEM),
        input_output_aliases={1: 0},           # result overwrites x_pad's HBM buffer
        cost_estimate=cost,
    )(rescale, x_pad, *flat_params)
    return out_pad[:, :hidden_size].astype(x.dtype)


def init_params(key, hidden_size, n_layers, widen_factor):
    """Deterministic parameter init mirroring the PyTorch module shapes."""
    layers = []
    for i in range(n_layers):
        in_dim = hidden_size if i == 0 else hidden_size * widen_factor
        out_dim = hidden_size if i == n_layers - 1 else hidden_size * widen_factor
        key, kw, kb = jax.random.split(key, 3)
        bound = 1.0 / (in_dim ** 0.5)
        w = jax.random.uniform(kw, (out_dim, in_dim), jnp.float32, -bound, bound)
        b = jax.random.uniform(kb, (out_dim,), jnp.float32, -bound, bound)
        gamma = jnp.ones((out_dim,), jnp.float32)     # BatchNorm weight init
        beta = jnp.zeros((out_dim,), jnp.float32)     # BatchNorm bias init
        layers.append((w, b, gamma, beta))
    rescale = jnp.full((1,), 1e-3, jnp.float32)       # rezero init
    return layers, rescale


def prepare_params(layers, hidden_size):
    """One-time prep: transpose weights to [in, out] and zero-pad all feature
    dims to a multiple of LANE.

    Zero-padding invariant (relied on by the kernel): all padded rows/cols are
    built from jnp.zeros and only the real [in_dim, out_dim] block is written,
    so padded outputs are exactly 0 through Linear/BN/ReLU and never affect
    the real columns."""
    widest = max([hidden_size]
                 + [w.shape[0] for (w, _, _, _) in layers]
                 + [w.shape[1] for (w, _, _, _) in layers])
    pad = ((widest + LANE - 1) // LANE) * LANE

    def pad_row(v):
        return jnp.zeros((1, pad), jnp.float32).at[0, : v.shape[0]].set(v)

    prepared = []
    for (w, b, gamma, beta) in layers:
        out_dim, in_dim = w.shape
        wt = jnp.zeros((pad, pad), jnp.float32).at[:in_dim, :out_dim].set(w.T)
        prepared.append((wt, pad_row(b), pad_row(gamma), pad_row(beta)))
    return prepared


def _reference_forward(x, layers, rescale):
    """Pure-JAX reference matching PyTorch training-mode forward."""
    y = x
    for (w, b, gamma, beta) in layers:
        y = y @ w.T + b
        mean = jnp.mean(y, axis=0, keepdims=True)
        var = jnp.mean(jnp.square(y - mean), axis=0, keepdims=True)
        y = (y - mean) / jnp.sqrt(var + EPS)
        y = y * gamma + beta
        y = jnp.maximum(y, 0.0)
    return x + rescale[0] * y


if __name__ == "__main__":
    hidden_size = 32
    n_layers = 2
    widen_factor = 2
    B = 8

    key = jax.random.PRNGKey(0)
    key, kx = jax.random.split(key)
    x = jax.random.normal(kx, (B, hidden_size), jnp.float32)

    layers, rescale = init_params(key, hidden_size, n_layers, widen_factor)
    prepared = prepare_params(layers, hidden_size)

    out = resnet_block_forward(x, prepared, rescale,
                               hidden_size=hidden_size, n_layers=n_layers)
    out = jax.block_until_ready(out)

    ref = _reference_forward(x, layers, rescale)
    assert out.shape == (B, hidden_size)
    assert jnp.allclose(out, ref, atol=1e-5, rtol=1e-5), "mismatch vs JAX reference"

    print("KERNEL_OK")
</pallas_src>

<mosaic_0001>
module attributes {stable_mosaic.version = 11 : i64} {
  func.func @_block_kernel(%arg0: memref<1xf32, #tpu.memory_space<smem>>, %arg1: memref<8x128xf32, #tpu.memory_space<vmem>>, %arg2: memref<128x128xf32, #tpu.memory_space<vmem>>, %arg3: memref<1x128xf32, #tpu.memory_space<vmem>>, %arg4: memref<1x128xf32, #tpu.memory_space<vmem>>, %arg5: memref<1x128xf32, #tpu.memory_space<vmem>>, %arg6: memref<128x128xf32, #tpu.memory_space<vmem>>, %arg7: memref<1x128xf32, #tpu.memory_space<vmem>>, %arg8: memref<1x128xf32, #tpu.memory_space<vmem>>, %arg9: memref<1x128xf32, #tpu.memory_space<vmem>>, %arg10: memref<8x128xf32, #tpu.memory_space<vmem>>) attributes {dimension_semantics = [], scalar_prefetch = 0 : i64, scratch_operands = 0 : i64, tpu.core_type = #tpu.core_type<tc>} {
    %c0 = arith.constant 0 : index
    %c0_0 = arith.constant 0 : index
    %0 = vector.load %arg1[%c0, %c0_0] : memref<8x128xf32, #tpu.memory_space<vmem>>, vector<8x128xf32>
    %c0_1 = arith.constant 0 : index
    %c0_2 = arith.constant 0 : index
    %1 = vector.load %arg2[%c0_1, %c0_2] : memref<128x128xf32, #tpu.memory_space<vmem>>, vector<128x128xf32>
    %cst = arith.constant dense<0.000000e+00> : vector<8x128xf32>
    %2 = tpu.matmul %0, %1, %cst {dimension_numbers = #tpu.dot_dimension_numbers<[1], [0], [0], [1], [0, 0, 1, 1], [], []>} : vector<8x128xf32>, vector<128x128xf32>, vector<8x128xf32> -> vector<8x128xf32>
    %c0_3 = arith.constant 0 : index
    %c0_4 = arith.constant 0 : index
    %3 = vector.load %arg3[%c0_3, %c0_4] : memref<1x128xf32, #tpu.memory_space<vmem>>, vector<1x128xf32>
    %4 = vector.broadcast %3 : vector<1x128xf32> to vector<8x128xf32>
    %5 = arith.addf %2, %4 : vector<8x128xf32>
    %cst_5 = arith.constant dense<0.000000e+00> : vector<128xf32>
    %6 = vector.multi_reduction <add>, %5, %cst_5 [0] : vector<8x128xf32> to vector<128xf32>
    %7 = vector.shape_cast %6 : vector<128xf32> to vector<1x128xf32>
    %cst_6 = arith.constant 8.000000e+00 : f32
    %8 = vector.broadcast %cst_6 : f32 to vector<1x128xf32>
    %9 = arith.divf %7, %8 : vector<1x128xf32>
    %10 = vector.broadcast %9 : vector<1x128xf32> to vector<8x128xf32>
    %11 = arith.subf %5, %10 : vector<8x128xf32>
    %12 = arith.mulf %11, %11 : vector<8x128xf32>
    %cst_7 = arith.constant dense<0.000000e+00> : vector<128xf32>
    %13 = vector.multi_reduction <add>, %12, %cst_7 [0] : vector<8x128xf32> to vector<128xf32>
    %14 = vector.shape_cast %13 : vector<128xf32> to vector<1x128xf32>
    %cst_8 = arith.constant 8.000000e+00 : f32
    %15 = vector.broadcast %cst_8 : f32 to vector<1x128xf32>
    %16 = arith.divf %14, %15 : vector<1x128xf32>
    %cst_9 = arith.constant 9.99999974E-6 : f32
    %17 = vector.broadcast %cst_9 : f32 to vector<1x128xf32>
    %18 = arith.addf %16, %17 : vector<1x128xf32>
    %19 = math.rsqrt %18 : vector<1x128xf32>
    %20 = vector.broadcast %19 : vector<1x128xf32> to vector<8x128xf32>
    %21 = arith.mulf %11, %20 : vector<8x128xf32>
    %c0_10 = arith.constant 0 : index
    %c0_11 = arith.constant 0 : index
    %22 = vector.load %arg4[%c0_10, %c0_11] : memref<1x128xf32, #tpu.memory_space<vmem>>, vector<1x128xf32>
    %23 = vector.broadcast %22 : vector<1x128xf32> to vector<8x128xf32>
    %24 = arith.mulf %21, %23 : vector<8x128xf32>
    %c0_12 = arith.constant 0 : index
    %c0_13 = arith.constant 0 : index
    %25 = vector.load %arg5[%c0_12, %c0_13] : memref<1x128xf32, #tpu.memory_space<vmem>>, vector<1x128xf32>
    %26 = vector.broadcast %25 : vector<1x128xf32> to vector<8x128xf32>
    %27 = arith.addf %24, %26 : vector<8x128xf32>
    %cst_14 = arith.constant 0.000000e+00 : f32
    %28 = vector.broadcast %cst_14 : f32 to vector<8x128xf32>
    %29 = arith.maximumf %27, %28 : vector<8x128xf32>
    %c0_15 = arith.constant 0 : index
    %c0_16 = arith.constant 0 : index
    %30 = vector.load %arg6[%c0_15, %c0_16] : memref<128x128xf32, #tpu.memory_space<vmem>>, vector<128x128xf32>
    %cst_17 = arith.constant dense<0.000000e+00> : vector<8x128xf32>
    %31 = tpu.matmul %29, %30, %cst_17 {dimension_numbers = #tpu.dot_dimension_numbers<[1], [0], [0], [1], [0, 0, 1, 1], [], []>} : vector<8x128xf32>, vector<128x128xf32>, vector<8x128xf32> -> vector<8x128xf32>
    %c0_18 = arith.constant 0 : index
    %c0_19 = arith.constant 0 : index
    %32 = vector.load %arg7[%c0_18, %c0_19] : memref<1x128xf32, #tpu.memory_space<vmem>>, vector<1x128xf32>
    %33 = vector.broadcast %32 : vector<1x128xf32> to vector<8x128xf32>
    %34 = arith.addf %31, %33 : vector<8x128xf32>
    %cst_20 = arith.constant dense<0.000000e+00> : vector<128xf32>
    %35 = vector.multi_reduction <add>, %34, %cst_20 [0] : vector<8x128xf32> to vector<128xf32>
    %36 = vector.shape_cast %35 : vector<128xf32> to vector<1x128xf32>
    %cst_21 = arith.constant 8.000000e+00 : f32
    %37 = vector.broadcast %cst_21 : f32 to vector<1x128xf32>
    %38 = arith.divf %36, %37 : vector<1x128xf32>
    %39 = vector.broadcast %38 : vector<1x128xf32> to vector<8x128xf32>
    %40 = arith.subf %34, %39 : vector<8x128xf32>
    %41 = arith.mulf %40, %40 : vector<8x128xf32>
    %cst_22 = arith.constant dense<0.000000e+00> : vector<128xf32>
    %42 = vector.multi_reduction <add>, %41, %cst_22 [0] : vector<8x128xf32> to vector<128xf32>
    %43 = vector.shape_cast %42 : vector<128xf32> to vector<1x128xf32>
    %cst_23 = arith.constant 8.000000e+00 : f32
    %44 = vector.broadcast %cst_23 : f32 to vector<1x128xf32>
    %45 = arith.divf %43, %44 : vector<1x128xf32>
    %cst_24 = arith.constant 9.99999974E-6 : f32
    %46 = vector.broadcast %cst_24 : f32 to vector<1x128xf32>
    %47 = arith.addf %45, %46 : vector<1x128xf32>
    %48 = math.rsqrt %47 : vector<1x128xf32>
    %49 = vector.broadcast %48 : vector<1x128xf32> to vector<8x128xf32>
    %50 = arith.mulf %40, %49 : vector<8x128xf32>
    %c0_25 = arith.constant 0 : index
    %c0_26 = arith.constant 0 : index
    %51 = vector.load %arg8[%c0_25, %c0_26] : memref<1x128xf32, #tpu.memory_space<vmem>>, vector<1x128xf32>
    %52 = vector.broadcast %51 : vector<1x128xf32> to vector<8x128xf32>
    %53 = arith.mulf %50, %52 : vector<8x128xf32>
    %c0_27 = arith.constant 0 : index
    %c0_28 = arith.constant 0 : index
    %54 = vector.load %arg9[%c0_27, %c0_28] : memref<1x128xf32, #tpu.memory_space<vmem>>, vector<1x128xf32>
    %55 = vector.broadcast %54 : vector<1x128xf32> to vector<8x128xf32>
    %56 = arith.addf %53, %55 : vector<8x128xf32>
    %cst_29 = arith.constant 0.000000e+00 : f32
    %57 = vector.broadcast %cst_29 : f32 to vector<8x128xf32>
    %58 = arith.maximumf %56, %57 : vector<8x128xf32>
    %c0_30 = arith.constant 0 : index
    %59 = memref.load %arg0[%c0_30] : memref<1xf32, #tpu.memory_space<smem>>
    %60 = vector.broadcast %59 : f32 to vector<8x128xf32>
    %61 = arith.mulf %60, %58 : vector<8x128xf32>
    %62 = arith.addf %0, %61 : vector<8x128xf32>
    %c0_31 = arith.constant 0 : index
    %c0_32 = arith.constant 0 : index
    %63 = vector.load %arg10[%c0_31, %c0_32] : memref<8x128xf32, #tpu.memory_space<vmem>>, vector<8x128xf32>
    tpu.vector_store %arg10[%c0_31, %c0_32], %62 {strides = array<i32>} : memref<8x128xf32, #tpu.memory_space<vmem>>, vector<8x128xf32>,
    return
  }
}

</mosaic_0001>

<llo_original>
// kernel: resnet_block_forward.1
$region0: #{resnet_block_forward.1}
  #allocation0 [shape = 'u32[]', space=smem, size = 0x4, offset = 0x4, fixed_abs, tag = 'smem constant byte address 0x4 - core index']
  #allocation1 [shape = 'u32[144,128]{1,0:T(1,128)}', space=vmem, size = 0x12000, scoped, tag = 'internal scratch']
  #allocation2 [shape = 'f32[1]{0:T(128)S(6)}', space=smem, size = 0x200, scoped, tag = 'scoped memory for resnet_block_forward.1']
  %s0 = inlined_call_operand.<no memory space> [shape: f32[1], index: 0, kind: input, shape index: {}]
  %s1 = inlined_call_operand.vmem [shape: f32[8,128], index: 1, kind: input, shape index: {}, may-alias: {1,10}]
  %s2 = inlined_call_operand.hbm [shape: f32[128,128], index: 2, kind: input, shape index: {}]
  %s3 = inlined_call_operand.vmem [shape: f32[1,128], index: 3, kind: input, shape index: {}]
  %s4 = inlined_call_operand.vmem [shape: f32[1,128], index: 4, kind: input, shape index: {}]
  %s5 = inlined_call_operand.vmem [shape: f32[1,128], index: 5, kind: input, shape index: {}]
  %s6 = inlined_call_operand.hbm [shape: f32[128,128], index: 6, kind: input, shape index: {}]
  %s7 = inlined_call_operand.vmem [shape: f32[1,128], index: 7, kind: input, shape index: {}]
  %s8 = inlined_call_operand.vmem [shape: f32[1,128], index: 8, kind: input, shape index: {}]
  %s9 = inlined_call_operand.vmem [shape: f32[1,128], index: 9, kind: input, shape index: {}]
  %s10 = inlined_call_operand.vmem [shape: f32[8,128], index: 10, kind: output, shape index: {}, may-alias: {1,10}]
  %s11 = sld [smem:[#allocation0]]
  $region58: #{resnet_block_forward.1} parent=0
    _
  %s13 = ssub.s32 1, %s11
  %s14 = scalar_select 0, %s13, %s11
  %15 = sst [smem:[#allocation2]] %s0
  $region1: #{resnet_block_forward.1} parent=0
    #allocation3 [shape = 'u8[65536]{0}', space=vmem, size = 0x10000, scoped, tag = 'input window, operand 2, single buffered']
    #allocation4 [shape = 's32[1]{0}', space=sflag, size = 0x4, scoped, tag = 'scoped memory for resnet_block_forward.1']
    #allocation5 [shape = 'u8[65536]{0}', space=vmem, size = 0x10000, scoped, tag = 'input window, operand 6, single buffered']
    #allocation6 [shape = 's32[1]{0}', space=sflag, size = 0x4, scoped, tag = 'scoped memory for resnet_block_forward.1']
    %16 = vsyncpa [#allocation4], 0
    %17 = vsyncpa [#allocation6], 0
    // Predicated region
    $region2: #{resnet_block_forward.1} parent=1 // pred_check
      _
    $region3: #{resnet_block_forward.1} parent=1 // pred_check_branch
      %19 = sbr.rel (0) target = $region5
    $region4: #{resnet_block_forward.1} parent=1 // pred_region
      _
    $region5: #{resnet_block_forward.1} parent=1 // pred_fallthru
      _
    // Predicated region
    $region6: #{resnet_block_forward.1} parent=1 // pred_check
      _
    $region7: #{resnet_block_forward.1} parent=1 // pred_check_branch
      %21 = sbr.rel (0) target = $region9
    $region8: #{resnet_block_forward.1} parent=1 // pred_region
      _
    $region9: #{resnet_block_forward.1} parent=1 // pred_fallthru
      _
    // Predicated region
    $region10: #{resnet_block_forward.1} parent=1 // pred_check
      _
    $region11: #{resnet_block_forward.1} parent=1 // pred_check_branch
      %23 = sbr.rel (0) target = $region13
    $region12: #{resnet_block_forward.1} parent=1 // pred_region
      %s25 = ssub.s32 2048, 2048
      %26 = vsyncadd [#allocation4], %s25
      %s27 = sshll.u32 [#allocation3], 4
      %s28 = int_to_ptr.vmem [resolvable:$true] %s27
      %33 = dma.hbm_to_vmem [thread:$0]  %s2, 2048, %s28, [#allocation4], 128, 128, 8
    $region13: #{resnet_block_forward.1} parent=1 // pred_fallthru
      _
    // Predicated region
    $region14: #{resnet_block_forward.1} parent=1 // pred_check
      _
    $region15: #{resnet_block_forward.1} parent=1 // pred_check_branch
      %35 = sbr.rel (0) target = $region17
    $region16: #{resnet_block_forward.1} parent=1 // pred_region
      _
    $region17: #{resnet_block_forward.1} parent=1 // pred_fallthru
      _
    // Predicated region
    $region18: #{resnet_block_forward.1} parent=1 // pred_check
      _
    $region19: #{resnet_block_forward.1} parent=1 // pred_check_branch
      %37 = sbr.rel (0) target = $region21
    $region20: #{resnet_block_forward.1} parent=1 // pred_region
      _
    $region21: #{resnet_block_forward.1} parent=1 // pred_fallthru
      _
    // Predicated region
    $region22: #{resnet_block_forward.1} parent=1 // pred_check
      _
    $region23: #{resnet_block_forward.1} parent=1 // pred_check_branch
      %39 = sbr.rel (0) target = $region25
    $region24: #{resnet_block_forward.1} parent=1 // pred_region
      _
    $region25: #{resnet_block_forward.1} parent=1 // pred_fallthru
      _
    // Predicated region
    $region26: #{resnet_block_forward.1} parent=1 // pred_check
      _
    $region27: #{resnet_block_forward.1} parent=1 // pred_check_branch
      %41 = sbr.rel (0) target = $region29
    $region28: #{resnet_block_forward.1} parent=1 // pred_region
      %s43 = ssub.s32 2048, 2048
      %44 = vsyncadd [#allocation6], %s43
      %s45 = sshll.u32 [#allocation5], 4
      %s46 = int_to_ptr.vmem [resolvable:$true] %s45
      %51 = dma.hbm_to_vmem [thread:$0]  %s6, 2048, %s46, [#allocation6], 128, 128, 8
    $region29: #{resnet_block_forward.1} parent=1 // pred_fallthru
      _
    // Predicated region
    $region30: #{resnet_block_forward.1} parent=1 // pred_check
      _
    $region31: #{resnet_block_forward.1} parent=1 // pred_check_branch
      %53 = sbr.rel (0) target = $region33
    $region32: #{resnet_block_forward.1} parent=1 // pred_region
      _
    $region33: #{resnet_block_forward.1} parent=1 // pred_fallthru
      _
    // Predicated region
    $region34: #{resnet_block_forward.1} parent=1 // pred_check
      _
    $region35: #{resnet_block_forward.1} parent=1 // pred_check_branch
      %55 = sbr.rel (0) target = $region37
    $region36: #{resnet_block_forward.1} parent=1 // pred_region
      _
    $region37: #{resnet_block_forward.1} parent=1 // pred_fallthru
      _
    // Predicated region
    $region38: #{resnet_block_forward.1} parent=1 // pred_check
      _
    $region39: #{resnet_block_forward.1} parent=1 // pred_check_branch
      %57 = sbr.rel (0) target = $region41
    $region40: #{resnet_block_forward.1} parent=1 // pred_region
      _
    $region41: #{resnet_block_forward.1} parent=1 // pred_fallthru
      _
    // Predicated region
    $region42: #{resnet_block_forward.1} parent=1 // pred_check
      _
    $region43: #{resnet_block_forward.1} parent=1 // pred_check_branch
      %59 = sbr.rel (0) target = $region45
    $region44: #{resnet_block_forward.1} parent=1 // pred_region
      %60 = dma.done [#allocation4], 2048
    $region45: #{resnet_block_forward.1} parent=1 // pred_fallthru
      _
    // Predicated region
    $region46: #{resnet_block_forward.1} parent=1 // pred_check
      _
    $region47: #{resnet_block_forward.1} parent=1 // pred_check_branch
      %62 = sbr.rel (0) target = $region49
    $region48: #{resnet_block_forward.1} parent=1 // pred_region
      %63 = dma.done [#allocation6], 2048
    $region49: #{resnet_block_forward.1} parent=1 // pred_fallthru
      _
    %v64 = vld [vmem:[%s1] sm:$0xff]
    %v65 = vld [vmem:[#allocation3] sm:$0xff]
    %v66 = vld [vmem:[#allocation3 + $0x8] sm:$0xff]
    %v67 = vld [vmem:[#allocation3 + $0x10] sm:$0xff]
    %v68 = vld [vmem:[#allocation3 + $0x18] sm:$0xff]
    %v69 = vld [vmem:[#allocation3 + $0x20] sm:$0xff]
    %v70 = vld [vmem:[#allocation3 + $0x28] sm:$0xff]
    %v71 = vld [vmem:[#allocation3 + $0x30] sm:$0xff]
    %v72 = vld [vmem:[#allocation3 + $0x38] sm:$0xff]
    %v73 = vld [vmem:[#allocation3 + $0x40] sm:$0xff]
    %v74 = vld [vmem:[#allocation3 + $0x48] sm:$0xff]
    %v75 = vld [vmem:[#allocation3 + $0x50] sm:$0xff]
    %v76 = vld [vmem:[#allocation3 + $0x58] sm:$0xff]
    %v77 = vld [vmem:[#allocation3 + $0x60] sm:$0xff]
    %v78 = vld [vmem:[#allocation3 + $0x68] sm:$0xff]
    %v79 = vld [vmem:[#allocation3 + $0x70] sm:$0xff]
    %v80 = vld [vmem:[#allocation3 + $0x78] sm:$0xff]
    %v81 = vld [vmem:[%s3] sm:$0x1]
    %v83 = vlaneseq
    %v84 = vshrl.u32 %v83, 7
    %v85 = vsub.s32 0, %v84
    %v86 = vrot.slane %v81, %v85
    %88 = vmatprep.subr.mxu0 0.0
    %89 = vmatpush1.msra.mxu0 %v65
    %90 = vmatprep.subr.mxu0 0.0
    %91 = vmatpush1.msra.mxu0 %v66
    %92 = vmatprep.subr.mxu0 0.0
    %93 = vmatpush1.msra.mxu0 %v67
    %94 = vmatprep.subr.mxu0 0.0
    %95 = vmatpush1.msra.mxu0 %v68
    %96 = vmatprep.subr.mxu0 0.0
    %97 = vmatpush1.msra.mxu0 %v69
    %98 = vmatprep.subr.mxu0 0.0
    %99 = vmatpush1.msra.mxu0 %v70
    %100 = vmatprep.subr.mxu0 0.0
    %101 = vmatpush1.msra.mxu0 %v71
    %102 = vmatprep.subr.mxu0 0.0
    %103 = vmatpush1.msra.mxu0 %v72
    %104 = vmatprep.subr.mxu0 0.0
    %105 = vmatpush1.msra.mxu0 %v73
    %106 = vmatprep.subr.mxu0 0.0
    %107 = vmatpush1.msra.mxu0 %v74
    %108 = vmatprep.subr.mxu0 0.0
    %109 = vmatpush1.msra.mxu0 %v75
    %110 = vmatprep.subr.mxu0 0.0
    %111 = vmatpush1.msra.mxu0 %v76
    %112 = vmatprep.subr.mxu0 0.0
    %113 = vmatpush1.msra.mxu0 %v77
    %114 = vmatprep.subr.mxu0 0.0
    %115 = vmatpush1.msra.mxu0 %v78
    %116 = vmatprep.subr.mxu0 0.0
    %117 = vmatpush1.msra.mxu0 %v79
    %118 = vmatprep.subr.mxu0 0.0
    %119 = vmatpush1.msra.mxu0 %v80
    %120 = vmatprep.subr.mxu0 0.0
    %121 = vmatpush1.msra.mxu0 0.0
    %122 = vmatprep.subr.mxu0 0.0
    %123 = vmatpush1.msra.mxu0 0.0
    %124 = vmatprep.subr.mxu0 0.0
    %125 = vmatpush1.msra.mxu0 0.0
    %126 = vmatprep.subr.mxu0 0.0
    %127 = vmatpush1.msra.mxu0 0.0
    %128 = vmatprep.subr.mxu0 0.0
    %129 = vmatpush1.msra.mxu0 0.0
    %130 = vmatprep.subr.mxu0 0.0
    %131 = vmatpush1.msra.mxu0 0.0
    %132 = vmatprep.subr.mxu0 0.0
    %133 = vmatpush1.msra.mxu0 0.0
    %134 = vmatprep.subr.mxu0 0.0
    %135 = vmatpush1.msra.mxu0 0.0
    %136 = vmatprep.subr.mxu0 0.0
    %137 = vmatpush1.msra.mxu0 0.0
    %138 = vmatprep.subr.mxu0 0.0
    %139 = vmatpush1.msra.mxu0 0.0
    %140 = vmatprep.subr.mxu0 0.0
    %141 = vmatpush1.msra.mxu0 0.0
    %142 = vmatprep.subr.mxu0 0.0
    %143 = vmatpush1.msra.mxu0 0.0
    %144 = vmatprep.subr.mxu0 0.0
    %145 = vmatpush1.msra.mxu0 0.0
    %146 = vmatprep.subr.mxu0 0.0
    %147 = vmatpush1.msra.mxu0 0.0
    %148 = vmatprep.subr.mxu0 0.0
    %149 = vmatpush1.msra.mxu0 0.0
    %150 = vmatprep.subr.mxu0 0.0
    %151 = vmatpush1.msra.mxu0 0.0
    %152 = vmatprep.mubr.f32.mxu0 0.0
    %153 = vmatmul.mubr.f32.gmra.mrb[0].mxu0 %v64
    %v154 = vpop.f32.mrb[0].mxu0
    %v155 = vadd.f32 %v86, %v154
    %v156 = vpop.f32.mrb[0].mxu0
    %157 = vdwg.mxu0
    %v158 = vrot.slane %v155, 4
    %v159 = vadd.f32 %v155, %v158
    %v160 = vrot.slane %v159, 2
    %v161 = vadd.f32 %v159, %v160
    %v162 = vrot.slane %v161, 1
    %v163 = vadd.f32 %v161, %v162
    %v164 = vrcp.pop 8.0
    %v165 = vmul.f32 %v163, %v164
    %v166 = vsub.f32 %v155, %v165
    %v167 = vmul.f32 %v166, %v166
    %v168 = vrot.slane %v167, 4
    %v169 = vadd.f32 %v167, %v168
    %v170 = vrot.slane %v169, 2
    %v171 = vadd.f32 %v169, %v170
    %v172 = vrot.slane %v171, 1
    %v173 = vadd.f32 %v171, %v172
    %v174 = vmul.f32 %v173, %v164
    %v175 = vadd.f32 %v174, 1e-05
    %v176 = vrsqrt.pop %v175
    %v177 = vmul.f32 %v166, %v176
    %v178 = vld [vmem:[%s4] sm:$0x1]
    %v180 = vlaneseq
    %v181 = vshrl.u32 %v180, 7
    %v182 = vsub.s32 0, %v181
    %v183 = vrot.slane %v178, %v182
    %v185 = vmul.f32 %v177, %v183
    %v186 = vld [vmem:[%s5] sm:$0x1]
    %v188 = vlaneseq
    %v189 = vshrl.u32 %v188, 7
    %v190 = vsub.s32 0, %v189
    %v191 = vrot.slane %v186, %v190
    %v193 = vadd.f32 %v185, %v191
    %v194 = vmax.f32 %v193, 0.0
    %v195 = vld [vmem:[#allocation5] sm:$0xff]
    %v196 = vld [vmem:[#allocation5 + $0x8] sm:$0xff]
    %v197 = vld [vmem:[#allocation5 + $0x10] sm:$0xff]
    %v198 = vld [vmem:[#allocation5 + $0x18] sm:$0xff]
    %v199 = vld [vmem:[#allocation5 + $0x20] sm:$0xff]
    %v200 = vld [vmem:[#allocation5 + $0x28] sm:$0xff]
    %v201 = vld [vmem:[#allocation5 + $0x30] sm:$0xff]
    %v202 = vld [vmem:[#allocation5 + $0x38] sm:$0xff]
    %v203 = vld [vmem:[#allocation5 + $0x40] sm:$0xff]
    %v204 = vld [vmem:[#allocation5 + $0x48] sm:$0xff]
    %v205 = vld [vmem:[#allocation5 + $0x50] sm:$0xff]
    %v206 = vld [vmem:[#allocation5 + $0x58] sm:$0xff]
    %v207 = vld [vmem:[#allocation5 + $0x60] sm:$0xff]
    %v208 = vld [vmem:[#allocation5 + $0x68] sm:$0xff]
    %v209 = vld [vmem:[#allocation5 + $0x70] sm:$0xff]
    %v210 = vld [vmem:[#allocation5 + $0x78] sm:$0xff]
    %v211 = vld [vmem:[%s7] sm:$0x1]
    %v213 = vlaneseq
    %v214 = vshrl.u32 %v213, 7
    %v215 = vsub.s32 0, %v214
    %v216 = vrot.slane %v211, %v215
    %218 = vmatprep.subr.mxu0 0.0
    %219 = vmatpush1.msra.mxu0 %v195
    %220 = vmatprep.subr.mxu0 0.0
    %221 = vmatpush1.msra.mxu0 %v196
    %222 = vmatprep.subr.mxu0 0.0
    %223 = vmatpush1.msra.mxu0 %v197
    %224 = vmatprep.subr.mxu0 0.0
    %225 = vmatpush1.msra.mxu0 %v198
    %226 = vmatprep.subr.mxu0 0.0
    %227 = vmatpush1.msra.mxu0 %v199
    %228 = vmatprep.subr.mxu0 0.0
    %229 = vmatpush1.msra.mxu0 %v200
    %230 = vmatprep.subr.mxu0 0.0
    %231 = vmatpush1.msra.mxu0 %v201
    %232 = vmatprep.subr.mxu0 0.0
    %233 = vmatpush1.msra.mxu0 %v202
    %234 = vmatprep.subr.mxu0 0.0
    %235 = vmatpush1.msra.mxu0 %v203
    %236 = vmatprep.subr.mxu0 0.0
    %237 = vmatpush1.msra.mxu0 %v204
    %238 = vmatprep.subr.mxu0 0.0
    %239 = vmatpush1.msra.mxu0 %v205
    %240 = vmatprep.subr.mxu0 0.0
    %241 = vmatpush1.msra.mxu0 %v206
    %242 = vmatprep.subr.mxu0 0.0
    %243 = vmatpush1.msra.mxu0 %v207
    %244 = vmatprep.subr.mxu0 0.0
    %245 = vmatpush1.msra.mxu0 %v208
    %246 = vmatprep.subr.mxu0 0.0
    %247 = vmatpush1.msra.mxu0 %v209
    %248 = vmatprep.subr.mxu0 0.0
    %249 = vmatpush1.msra.mxu0 %v210
    %250 = vmatprep.subr.mxu0 0.0
    %251 = vmatpush1.msra.mxu0 0.0
    %252 = vmatprep.subr.mxu0 0.0
    %253 = vmatpush1.msra.mxu0 0.0
    %254 = vmatprep.subr.mxu0 0.0
    %255 = vmatpush1.msra.mxu0 0.0
    %256 = vmatprep.subr.mxu0 0.0
    %257 = vmatpush1.msra.mxu0 0.0
    %258 = vmatprep.subr.mxu0 0.0
    %259 = vmatpush1.msra.mxu0 0.0
    %260 = vmatprep.subr.mxu0 0.0
    %261 = vmatpush1.msra.mxu0 0.0
    %262 = vmatprep.subr.mxu0 0.0
    %263 = vmatpush1.msra.mxu0 0.0
    %264 = vmatprep.subr.mxu0 0.0
    %265 = vmatpush1.msra.mxu0 0.0
    %266 = vmatprep.subr.mxu0 0.0
    %267 = vmatpush1.msra.mxu0 0.0
    %268 = vmatprep.subr.mxu0 0.0
    %269 = vmatpush1.msra.mxu0 0.0
    %270 = vmatprep.subr.mxu0 0.0
    %271 = vmatpush1.msra.mxu0 0.0
    %272 = vmatprep.subr.mxu0 0.0
    %273 = vmatpush1.msra.mxu0 0.0
    %274 = vmatprep.subr.mxu0 0.0
    %275 = vmatpush1.msra.mxu0 0.0
    %276 = vmatprep.subr.mxu0 0.0
    %277 = vmatpush1.msra.mxu0 0.0
    %278 = vmatprep.subr.mxu0 0.0
    %279 = vmatpush1.msra.mxu0 0.0
    %280 = vmatprep.subr.mxu0 0.0
    %281 = vmatpush1.msra.mxu0 0.0
    %282 = vmatprep.mubr.f32.mxu0 0.0
    %283 = vmatmul.mubr.f32.gmra.mrb[0].mxu0 %v194
    %v284 = vpop.f32.mrb[0].mxu0
    %v285 = vadd.f32 %v216, %v284
    %v286 = vpop.f32.mrb[0].mxu0
    %287 = vdwg.mxu0
    %v288 = vrot.slane %v285, 4
    %v289 = vadd.f32 %v285, %v288
    %v290 = vrot.slane %v289, 2
    %v291 = vadd.f32 %v289, %v290
    %v292 = vrot.slane %v291, 1
    %v293 = vadd.f32 %v291, %v292
    %v294 = vmul.f32 %v293, %v164
    %v295 = vsub.f32 %v285, %v294
    %v296 = vmul.f32 %v295, %v295
    %v297 = vrot.slane %v296, 4
    %v298 = vadd.f32 %v296, %v297
    %v299 = vrot.slane %v298, 2
    %v300 = vadd.f32 %v298, %v299
    %v301 = vrot.slane %v300, 1
    %v302 = vadd.f32 %v300, %v301
    %v303 = vmul.f32 %v302, %v164
    %v304 = vadd.f32 %v303, 1e-05
    %v305 = vrsqrt.pop %v304
    %v306 = vmul.f32 %v295, %v305
    %v307 = vld [vmem:[%s8] sm:$0x1]
    %v309 = vlaneseq
    %v310 = vshrl.u32 %v309, 7
    %v311 = vsub.s32 0, %v310
    %v312 = vrot.slane %v307, %v311
    %v314 = vmul.f32 %v306, %v312
    %v315 = vld [vmem:[%s9] sm:$0x1]
    %v317 = vlaneseq
    %v318 = vshrl.u32 %v317, 7
    %v319 = vsub.s32 0, %v318
    %v320 = vrot.slane %v315, %v319
    %v322 = vadd.f32 %v314, %v320
    %v323 = vmax.f32 %v322, 0.0
    %s324 = sld [smem:[#allocation2]]
    %v325 = vstv %s324
    %v326 = vmul.f32 %v325, %v323
    %v327 = vadd.f32 %v64, %v326
    %328 = vst [vmem:[%s10] sm:$0xff] %v327
    // Predicated region
    $region50: #{resnet_block_forward.1} parent=1 // pred_check
      _
    $region51: #{resnet_block_forward.1} parent=1 // pred_check_branch
      %330 = sbr.rel (0) target = $region53
    $region52: #{resnet_block_forward.1} parent=1 // pred_region
      _
    $region53: #{resnet_block_forward.1} parent=1 // pred_fallthru
      _
    // Predicated region
    $region54: #{resnet_block_forward.1} parent=1 // pred_check
      _
    $region55: #{resnet_block_forward.1} parent=1 // pred_check_branch
      %332 = sbr.rel (0) target = $region57
    $region56: #{resnet_block_forward.1} parent=1 // pred_region
      _
    $region57: #{resnet_block_forward.1} parent=1 // pred_fallthru
      _
    %333 = vsyncpa [#allocation4], 1
    %334 = vsyncpa [#allocation6], 1

</llo_original>
